<compile_context>
chip_gen: v7x
topology: tpu7x:2x2x1
jax: 0.10.0
libtpu: 0.0.40
codegen_flags: <defaults>
</compile_context>

<pallas_src>
from functools import partial

import numpy as np
import jax
import jax.numpy as jnp
from jax import lax
from jax.experimental import pallas as pl
from jax.experimental.pallas import tpu as pltpu

BN_EPS = 1e-5


# ----------------------------- host-side operators ---------------------------

def _interp_matrix_1d(out_size, in_size):
    """Rows of bilinear weights for nn.Upsample(scale=2, align_corners=True)."""
    m = np.zeros((out_size, in_size), np.float32)
    if in_size == 1:
        m[:, 0] = 1.0
        return m
    scale = (in_size - 1) / (out_size - 1)
    for i in range(out_size):
        pos = i * scale
        lo = min(int(np.floor(pos)), in_size - 1)
        hi = min(lo + 1, in_size - 1)
        frac = pos - lo
        m[i, lo] += 1.0 - frac
        m[i, hi] += frac
    return m


def _upsample_pad_1d_ops(h1, w1, h2, w2):
    """Separable 1-D operators.  Rows include the F.pad offset and the 1-px
    zero border needed by the following 3x3 'padding=1' conv."""
    h_up, w_up = 2 * h1, 2 * w1
    dy, dx = h2 - h_up, w2 - w_up
    assert dy >= 0 and dx >= 0, "only non-negative F.pad supported"
    uh_p = np.zeros((h2 + 2, h1), np.float32)
    uw_p = np.zeros((w2 + 2, w1), np.float32)
    uh_p[1 + dy // 2: 1 + dy // 2 + h_up, :] = _interp_matrix_1d(h_up, h1)
    uw_p[1 + dx // 2: 1 + dx // 2 + w_up, :] = _interp_matrix_1d(w_up, w1)
    return uh_p, uw_p


def _lower_conv_rows(w_hwio, wp_in, w_out):
    """Lower a 3x3 'padding=1' conv (HWIO weights, shape (3,3,cin,cout)) to a
    banded matrix that acts on the lane-concat of the 3 shifted row slabs of a
    zero-padded (h+2, wp_in*cin) activation; output layout (h, w_out*cout)."""
    kh, kw, cin, cout = w_hwio.shape
    op = np.zeros((kh, wp_in, cin, w_out, cout), np.float32)
    for dy in range(kh):
        for dx in range(kw):
            for j in range(w_out):
                op[dy, j + dx, :, j, :] = w_hwio[dy, dx]
    return op.reshape(kh * wp_in * cin, w_out * cout)


def make_params(key, in_channels, out_channels):
    """Deterministic synthetic parameters (shapes follow the nn.Module)."""
    mid = in_channels // 2
    ks = jax.random.split(key, 12)
    return dict(
        w1=0.2 * jax.random.normal(ks[0], (3, 3, in_channels, mid), jnp.float32),  # HWIO
        b1=0.1 * jax.random.normal(ks[1], (mid,), jnp.float32),
        g1=1.0 + 0.1 * jax.random.normal(ks[2], (mid,), jnp.float32),
        be1=0.1 * jax.random.normal(ks[3], (mid,), jnp.float32),
        rm1=0.1 * jax.random.normal(ks[4], (mid,), jnp.float32),
        rv1=0.5 + jnp.abs(jax.random.normal(ks[5], (mid,), jnp.float32)),
        w2=0.2 * jax.random.normal(ks[6], (3, 3, mid, out_channels), jnp.float32),  # HWIO
        b2=0.1 * jax.random.normal(ks[7], (out_channels,), jnp.float32),
        g2=1.0 + 0.1 * jax.random.normal(ks[8], (out_channels,), jnp.float32),
        be2=0.1 * jax.random.normal(ks[9], (out_channels,), jnp.float32),
        rm2=0.1 * jax.random.normal(ks[10], (out_channels,), jnp.float32),
        rv2=0.5 + jnp.abs(jax.random.normal(ks[11], (out_channels,), jnp.float32)),
    )


def prepare_operands(p, h1, w1, h, w, c1):
    """Fold bias + eval-mode BN scale into the conv weights, lower both convs to
    banded row-unfold operators, and build the separable upsample operators."""
    mid = p["w1"].shape[-1]
    cout = p["w2"].shape[-1]
    wp = w + 2

    s1 = np.asarray(p["g1"]) / np.sqrt(np.asarray(p["rv1"]) + BN_EPS)
    t1 = np.asarray(p["be1"]) + (np.asarray(p["b1"]) - np.asarray(p["rm1"])) * s1
    s2 = np.asarray(p["g2"]) / np.sqrt(np.asarray(p["rv2"]) + BN_EPS)
    t2 = np.asarray(p["be2"]) + (np.asarray(p["b2"]) - np.asarray(p["rm2"])) * s2
    w1s = np.asarray(p["w1"]) * s1            # BN scale folded into weights
    w2s = np.asarray(p["w2"]) * s2

    uh_p, uw_p = _upsample_pad_1d_ops(h1, w1, h, w)
    mw = np.kron(uw_p.T, np.eye(c1, dtype=np.float32))        # (w1*c1, wp*c1)

    # conv1 acts on cat([x2, x1_up], channel): the x2 slabs come first in the
    # in-kernel patch concat, then the x1_up slabs -> stack the two lowered
    # operators the same way (realizes torch.cat without moving data).
    w1big = np.concatenate(
        [_lower_conv_rows(w1s[:, :, :c1, :], wp, w),
         _lower_conv_rows(w1s[:, :, c1:, :], wp, w)], axis=0)  # (6*wp*c1, w*mid)
    w2big = _lower_conv_rows(w2s, wp, w)                       # (3*wp*mid, w*cout)

    t1row = np.tile(t1, w).reshape(1, w * mid).astype(np.float32)
    t2row = np.tile(t2, w).reshape(1, w * cout).astype(np.float32)
    return (jnp.asarray(uh_p), jnp.asarray(mw), jnp.asarray(w1big),
            jnp.asarray(t1row), jnp.asarray(w2big), jnp.asarray(t2row))


# ------------------------------- Pallas kernel -------------------------------

def _up_kernel(x1_ref, x2p_ref, uh_ref, mw_ref, w1_ref, t1_ref, w2_ref, t2_ref,
               o_ref, *, h, w, mid):
    wp = w + 2

    # separable bilinear upsample (+F.pad +1px conv border): two small matmuls.
    th = jnp.dot(uh_ref[...], x1_ref[0], preferred_element_type=jnp.float32)   # (hp, w1*c1)
    x1u = jnp.dot(th, mw_ref[...], preferred_element_type=jnp.float32)         # (hp, wp*c1)
    x2p = x2p_ref[0]                                                            # (hp, wp*c1)

    # conv1 over cat([x2, x1_up], C): row-unfolded im2col (lane concat of the 3
    # shifted row slabs of each branch) -> ONE dot with the lowered banded
    # weights (BN scale folded in), then shift + ReLU.
    patches1 = jnp.concatenate(
        [x2p[0:h], x2p[1:h + 1], x2p[2:h + 2],
         x1u[0:h], x1u[1:h + 1], x1u[2:h + 2]], axis=1)                         # (h, 6*wp*c1)
    y1 = jnp.dot(patches1, w1_ref[...], preferred_element_type=jnp.float32)
    y1 = jnp.maximum(y1 + t1_ref[...], 0.0)                                     # (h, w*mid)

    # zero border for the second 3x3 conv, built by concatenation (no scratch,
    # nothing to re-zero per step).
    zl = jnp.zeros((h, mid), jnp.float32)
    y1b = jnp.concatenate([zl, y1, zl], axis=1)                                 # (h, wp*mid)
    zr = jnp.zeros((1, wp * mid), jnp.float32)
    y1p = jnp.concatenate([zr, y1b, zr], axis=0)                                # (hp, wp*mid)

    # conv2: same row-unfolded im2col -> one dot, shift + ReLU.
    patches2 = jnp.concatenate([y1p[0:h], y1p[1:h + 1], y1p[2:h + 2]], axis=1)  # (h, 3*wp*mid)
    y2 = jnp.dot(patches2, w2_ref[...], preferred_element_type=jnp.float32)
    y2 = jnp.maximum(y2 + t2_ref[...], 0.0)                                     # (h, w*cout)

    # lane-dense (h, w*cout) store; wrapper reshapes back to NHWC.
    o_ref[0] = y2


def up_forward(x1, x2, params):
    """x1: (N, H1, W1, C1)  x2: (N, H, W, C1)  ->  (N, H, W, out_channels)."""
    n, h1, w1, c1 = x1.shape
    n2, h, w, c2 = x2.shape
    assert n == n2 and c1 == c2
    mid = params["w1"].shape[-1]
    cout = params["w2"].shape[-1]
    hp, wp = h + 2, w + 2

    uh_p, mw, w1big, t1row, w2big, t2row = prepare_operands(params, h1, w1, h, w, c1)

    # wrapper-side layout plumbing (free): pre-flattened x1, pre-padded x2.
    x1f = x1.reshape(n, h1, w1 * c1)
    x2p = jnp.pad(x2, ((0, 0), (1, 1), (1, 1), (0, 0))).reshape(n, hp, wp * c1)

    kernel = partial(_up_kernel, h=h, w=w, mid=mid)
    grid_spec = pltpu.PrefetchScalarGridSpec(
        num_scalar_prefetch=0,
        grid=(n,),
        in_specs=[
            pl.BlockSpec((1, h1, w1 * c1), lambda b: (b, 0, 0)),
            pl.BlockSpec((1, hp, wp * c1), lambda b: (b, 0, 0)),
            pl.BlockSpec((hp, h1), lambda b: (0, 0)),
            pl.BlockSpec((w1 * c1, wp * c1), lambda b: (0, 0)),
            pl.BlockSpec((6 * wp * c1, w * mid), lambda b: (0, 0)),
            pl.BlockSpec((1, w * mid), lambda b: (0, 0)),
            pl.BlockSpec((3 * wp * mid, w * cout), lambda b: (0, 0)),
            pl.BlockSpec((1, w * cout), lambda b: (0, 0)),
        ],
        out_specs=pl.BlockSpec((1, h, w * cout), lambda b: (b, 0, 0)),
    )
    out = pl.pallas_call(
        kernel,
        out_shape=jax.ShapeDtypeStruct((n, h, w * cout), jnp.float32),
        grid_spec=grid_spec,
        compiler_params=pltpu.CompilerParams(
            dimension_semantics=("parallel",),        # 2 TCs take one batch each on v7x
            vmem_limit_bytes=32 * 1024 * 1024),       # explicit, well under v7x's 64 MiB
    )(x1f, x2p, uh_p, mw, w1big, t1row, w2big, t2row)
    return out.reshape(n, h, w, cout)


# ------------------------------ pure-JAX reference ---------------------------

def reference(x1, x2, p):
    n, h1, w1, c1 = x1.shape
    _, h, w, _ = x2.shape
    uh = jnp.asarray(_interp_matrix_1d(2 * h1, h1))
    uw = jnp.asarray(_interp_matrix_1d(2 * w1, w1))
    x1u = jnp.einsum("ai,bj,nijc->nabc", uh, uw, x1)
    dy, dx = h - 2 * h1, w - 2 * w1
    x1u = jnp.pad(x1u, ((0, 0), (dy // 2, dy - dy // 2),
                        (dx // 2, dx - dx // 2), (0, 0)))
    x = jnp.concatenate([x2, x1u], axis=-1)           # torch.cat([x2, x1], 1)

    def conv_bn_relu(z, wgt, b, g, be, rm, rv):
        y = lax.conv_general_dilated(z, wgt, (1, 1), "SAME",
                                     dimension_numbers=("NHWC", "HWIO", "NHWC"))
        y = y + b
        y = (y - rm) / jnp.sqrt(rv + BN_EPS) * g + be
        return jnp.maximum(y, 0.0)

    y = conv_bn_relu(x, p["w1"], p["b1"], p["g1"], p["be1"], p["rm1"], p["rv1"])
    y = conv_bn_relu(y, p["w2"], p["b2"], p["g2"], p["be2"], p["rm2"], p["rv2"])
    return y


# ----------------------------------- main -------------------------------------

if __name__ == "__main__":
    # Up(in_channels=8, out_channels=4, bilinear=True)
    # x1 (decoder feature, NCHW (2,4,8,8)) and x2 (skip, NCHW (2,4,16,16)),
    # expressed here in NHWC.
    N, C1 = 2, 4
    IN_CH, OUT_CH = 2 * C1, 4
    H1 = W1 = 8
    H = W = 16

    key = jax.random.PRNGKey(0)
    k1, k2, kp = jax.random.split(key, 3)
    x1 = jax.random.normal(k1, (N, H1, W1, C1), jnp.float32)
    x2 = jax.random.normal(k2, (N, H, W, C1), jnp.float32)

    params = make_params(kp, IN_CH, OUT_CH)

    out = up_forward(x1, x2, params)
    out = jax.block_until_ready(out)

    ref = jax.block_until_ready(reference(x1, x2, params))
    assert out.shape == (N, H, W, OUT_CH), out.shape
    assert jnp.allclose(out, ref, rtol=1e-4, atol=1e-4), float(jnp.abs(out - ref).max())

    print("KERNEL_OK")
</pallas_src>

<mosaic_0001>
module attributes {stable_mosaic.version = 11 : i64} {
  func.func @_up_kernel(%arg0: i32, %arg1: memref<1x8x32xf32, #tpu.memory_space<vmem>>, %arg2: memref<1x18x72xf32, #tpu.memory_space<vmem>>, %arg3: memref<18x8xf32, #tpu.memory_space<vmem>>, %arg4: memref<32x72xf32, #tpu.memory_space<vmem>>, %arg5: memref<432x64xf32, #tpu.memory_space<vmem>>, %arg6: memref<1x64xf32, #tpu.memory_space<vmem>>, %arg7: memref<216x64xf32, #tpu.memory_space<vmem>>, %arg8: memref<1x64xf32, #tpu.memory_space<vmem>>, %arg9: memref<1x16x64xf32, #tpu.memory_space<vmem>>) attributes {dimension_semantics = [#tpu.dimension_semantics<parallel>], iteration_bounds = array<i64: 2>, scalar_prefetch = 0 : i64, scratch_operands = 0 : i64, tpu.core_type = #tpu.core_type<tc>, window_params = [{transform_indices = @transform_0, window_bounds = array<i64: 1, 8, 32>}, {transform_indices = @transform_1, window_bounds = array<i64: 1, 18, 72>}, {pipeline_mode = #tpu.pipeline_mode<synchronous>, transform_indices = @transform_2, window_bounds = array<i64: 18, 8>}, {pipeline_mode = #tpu.pipeline_mode<synchronous>, transform_indices = @transform_3, window_bounds = array<i64: 32, 72>}, {pipeline_mode = #tpu.pipeline_mode<synchronous>, transform_indices = @transform_4, window_bounds = array<i64: 432, 64>}, {pipeline_mode = #tpu.pipeline_mode<synchronous>, transform_indices = @transform_5, window_bounds = array<i64: 1, 64>}, {pipeline_mode = #tpu.pipeline_mode<synchronous>, transform_indices = @transform_6, window_bounds = array<i64: 216, 64>}, {pipeline_mode = #tpu.pipeline_mode<synchronous>, transform_indices = @transform_7, window_bounds = array<i64: 1, 64>}, {transform_indices = @transform_8, window_bounds = array<i64: 1, 16, 64>}]} {
    %c0 = arith.constant 0 : index
    %c0_0 = arith.constant 0 : index
    %0 = vector.load %arg3[%c0, %c0_0] : memref<18x8xf32, #tpu.memory_space<vmem>>, vector<18x8xf32>
    %c0_1 = arith.constant 0 : index
    %c0_2 = arith.constant 0 : index
    %c0_3 = arith.constant 0 : index
    %1 = vector.load %arg1[%c0_1, %c0_2, %c0_3] : memref<1x8x32xf32, #tpu.memory_space<vmem>>, vector<1x8x32xf32>
    %2 = vector.shape_cast %1 : vector<1x8x32xf32> to vector<8x32xf32>
    %cst = arith.constant dense<0.000000e+00> : vector<18x32xf32>
    %3 = tpu.matmul %0, %2, %cst {dimension_numbers = #tpu.dot_dimension_numbers<[1], [0], [0], [1], [0, 0, 1, 1], [], []>} : vector<18x8xf32>, vector<8x32xf32>, vector<18x32xf32> -> vector<18x32xf32>
    %c0_4 = arith.constant 0 : index
    %c0_5 = arith.constant 0 : index
    %4 = vector.load %arg4[%c0_4, %c0_5] : memref<32x72xf32, #tpu.memory_space<vmem>>, vector<32x72xf32>
    %cst_6 = arith.constant dense<0.000000e+00> : vector<18x72xf32>
    %5 = tpu.matmul %3, %4, %cst_6 {dimension_numbers = #tpu.dot_dimension_numbers<[1], [0], [0], [1], [0, 0, 1, 1], [], []>} : vector<18x32xf32>, vector<32x72xf32>, vector<18x72xf32> -> vector<18x72xf32>
    %c0_7 = arith.constant 0 : index
    %c0_8 = arith.constant 0 : index
    %c0_9 = arith.constant 0 : index
    %6 = vector.load %arg2[%c0_7, %c0_8, %c0_9] : memref<1x18x72xf32, #tpu.memory_space<vmem>>, vector<1x18x72xf32>
    %7 = vector.shape_cast %6 : vector<1x18x72xf32> to vector<18x72xf32>
    %8 = vector.extract_strided_slice %7 {offsets = [0, 0], sizes = [16, 72], strides = [1, 1]} : vector<18x72xf32> to vector<16x72xf32>
    %9 = vector.extract_strided_slice %7 {offsets = [1, 0], sizes = [16, 72], strides = [1, 1]} : vector<18x72xf32> to vector<16x72xf32>
    %10 = vector.extract_strided_slice %7 {offsets = [2, 0], sizes = [16, 72], strides = [1, 1]} : vector<18x72xf32> to vector<16x72xf32>
    %11 = vector.extract_strided_slice %5 {offsets = [0, 0], sizes = [16, 72], strides = [1, 1]} : vector<18x72xf32> to vector<16x72xf32>
    %12 = vector.extract_strided_slice %5 {offsets = [1, 0], sizes = [16, 72], strides = [1, 1]} : vector<18x72xf32> to vector<16x72xf32>
    %13 = vector.extract_strided_slice %5 {offsets = [2, 0], sizes = [16, 72], strides = [1, 1]} : vector<18x72xf32> to vector<16x72xf32>
    %14 = tpu.concatenate %8, %9, %10, %11, %12, %13 in 1 : vector<16x72xf32>, vector<16x72xf32>, vector<16x72xf32>, vector<16x72xf32>, vector<16x72xf32>, vector<16x72xf32> -> vector<16x432xf32>
    %c0_10 = arith.constant 0 : index
    %c0_11 = arith.constant 0 : index
    %15 = vector.load %arg5[%c0_10, %c0_11] : memref<432x64xf32, #tpu.memory_space<vmem>>, vector<432x64xf32>
    %cst_12 = arith.constant dense<0.000000e+00> : vector<16x64xf32>
    %16 = tpu.matmul %14, %15, %cst_12 {dimension_numbers = #tpu.dot_dimension_numbers<[1], [0], [0], [1], [0, 0, 1, 1], [], []>} : vector<16x432xf32>, vector<432x64xf32>, vector<16x64xf32> -> vector<16x64xf32>
    %c0_13 = arith.constant 0 : index
    %c0_14 = arith.constant 0 : index
    %17 = vector.load %arg6[%c0_13, %c0_14] : memref<1x64xf32, #tpu.memory_space<vmem>>, vector<1x64xf32>
    %18 = vector.broadcast %17 : vector<1x64xf32> to vector<16x64xf32>
    %19 = arith.addf %16, %18 : vector<16x64xf32>
    %cst_15 = arith.constant 0.000000e+00 : f32
    %20 = vector.broadcast %cst_15 : f32 to vector<16x64xf32>
    %21 = arith.maximumf %19, %20 : vector<16x64xf32>
    %cst_16 = arith.constant 0.000000e+00 : f32
    %22 = vector.broadcast %cst_16 : f32 to vector<16x4xf32>
    %23 = tpu.concatenate %22, %21, %22 in 1 : vector<16x4xf32>, vector<16x64xf32>, vector<16x4xf32> -> vector<16x72xf32>
    %cst_17 = arith.constant 0.000000e+00 : f32
    %24 = vector.broadcast %cst_17 : f32 to vector<1x72xf32>
    %25 = tpu.concatenate %24, %23, %24 in 0 : vector<1x72xf32>, vector<16x72xf32>, vector<1x72xf32> -> vector<18x72xf32>
    %26 = vector.extract_strided_slice %25 {offsets = [0, 0], sizes = [16, 72], strides = [1, 1]} : vector<18x72xf32> to vector<16x72xf32>
    %27 = vector.extract_strided_slice %25 {offsets = [1, 0], sizes = [16, 72], strides = [1, 1]} : vector<18x72xf32> to vector<16x72xf32>
    %28 = vector.extract_strided_slice %25 {offsets = [2, 0], sizes = [16, 72], strides = [1, 1]} : vector<18x72xf32> to vector<16x72xf32>
    %29 = tpu.concatenate %26, %27, %28 in 1 : vector<16x72xf32>, vector<16x72xf32>, vector<16x72xf32> -> vector<16x216xf32>
    %c0_18 = arith.constant 0 : index
    %c0_19 = arith.constant 0 : index
    %30 = vector.load %arg7[%c0_18, %c0_19] : memref<216x64xf32, #tpu.memory_space<vmem>>, vector<216x64xf32>
    %cst_20 = arith.constant dense<0.000000e+00> : vector<16x64xf32>
    %31 = tpu.matmul %29, %30, %cst_20 {dimension_numbers = #tpu.dot_dimension_numbers<[1], [0], [0], [1], [0, 0, 1, 1], [], []>} : vector<16x216xf32>, vector<216x64xf32>, vector<16x64xf32> -> vector<16x64xf32>
    %c0_21 = arith.constant 0 : index
    %c0_22 = arith.constant 0 : index
    %32 = vector.load %arg8[%c0_21, %c0_22] : memref<1x64xf32, #tpu.memory_space<vmem>>, vector<1x64xf32>
    %33 = vector.broadcast %32 : vector<1x64xf32> to vector<16x64xf32>
    %34 = arith.addf %31, %33 : vector<16x64xf32>
    %cst_23 = arith.constant 0.000000e+00 : f32
    %35 = vector.broadcast %cst_23 : f32 to vector<16x64xf32>
    %36 = arith.maximumf %34, %35 : vector<16x64xf32>
    %c0_24 = arith.constant 0 : index
    %c0_25 = arith.constant 0 : index
    %c0_26 = arith.constant 0 : index
    %37 = vector.load %arg9[%c0_24, %c0_25, %c0_26] : memref<1x16x64xf32, #tpu.memory_space<vmem>>, vector<1x16x64xf32>
    %38 = vector.shape_cast %37 : vector<1x16x64xf32> to vector<16x64xf32>
    %39 = vector.shape_cast %36 : vector<16x64xf32> to vector<1x16x64xf32>
    tpu.vector_store %arg9[%c0_24, %c0_25, %c0_26], %39 {strides = array<i32>} : memref<1x16x64xf32, #tpu.memory_space<vmem>>, vector<1x16x64xf32>,
    return
  }
  func.func @transform_0(%arg0: i32) -> (i32, i32, i32) {
    %c0_i32 = arith.constant 0 : i32
    %c0_i32_0 = arith.constant 0 : i32
    %c0_i32_1 = arith.constant 0 : i32
    return %arg0, %c0_i32, %c0_i32_0 : i32, i32, i32
  }
  func.func @transform_1(%arg0: i32) -> (i32, i32, i32) {
    %c0_i32 = arith.constant 0 : i32
    %c0_i32_0 = arith.constant 0 : i32
    %c0_i32_1 = arith.constant 0 : i32
    return %arg0, %c0_i32, %c0_i32_0 : i32, i32, i32
  }
  func.func @transform_2(%arg0: i32) -> (i32, i32) {
    %c0_i32 = arith.constant 0 : i32
    %c0_i32_0 = arith.constant 0 : i32
    %c0_i32_1 = arith.constant 0 : i32
    return %c0_i32, %c0_i32_0 : i32, i32
  }
  func.func @transform_3(%arg0: i32) -> (i32, i32) {
    %c0_i32 = arith.constant 0 : i32
    %c0_i32_0 = arith.constant 0 : i32
    %c0_i32_1 = arith.constant 0 : i32
    return %c0_i32, %c0_i32_0 : i32, i32
  }
  func.func @transform_4(%arg0: i32) -> (i32, i32) {
    %c0_i32 = arith.constant 0 : i32
    %c0_i32_0 = arith.constant 0 : i32
    %c0_i32_1 = arith.constant 0 : i32
    return %c0_i32, %c0_i32_0 : i32, i32
  }
  func.func @transform_5(%arg0: i32) -> (i32, i32) {
    %c0_i32 = arith.constant 0 : i32
    %c0_i32_0 = arith.constant 0 : i32
    %c0_i32_1 = arith.constant 0 : i32
    return %c0_i32, %c0_i32_0 : i32, i32
  }
  func.func @transform_6(%arg0: i32) -> (i32, i32) {
    %c0_i32 = arith.constant 0 : i32
    %c0_i32_0 = arith.constant 0 : i32
    %c0_i32_1 = arith.constant 0 : i32
    return %c0_i32, %c0_i32_0 : i32, i32
  }
  func.func @transform_7(%arg0: i32) -> (i32, i32) {
    %c0_i32 = arith.constant 0 : i32
    %c0_i32_0 = arith.constant 0 : i32
    %c0_i32_1 = arith.constant 0 : i32
    return %c0_i32, %c0_i32_0 : i32, i32
  }
  func.func @transform_8(%arg0: i32) -> (i32, i32, i32) {
    %c0_i32 = arith.constant 0 : i32
    %c0_i32_0 = arith.constant 0 : i32
    %c0_i32_1 = arith.constant 0 : i32
    return %arg0, %c0_i32, %c0_i32_0 : i32, i32, i32
  }
}

</mosaic_0001>

<llo_original>
// kernel: tpu_custom_call.1
$region0: #{tpu_custom_call.1}
  #allocation0 [shape = 'u32[]', space=smem, size = 0x4, offset = 0x4, fixed_abs, tag = 'smem constant byte address 0x4 - core index']
  #allocation1 [shape = 'u32[144,128]{1,0:T(1,128)}', space=vmem, size = 0x12000, scoped, tag = 'internal scratch']
  %s0 = inlined_call_operand.vmem [shape: f32[2,8,32], index: 0, kind: input, shape index: {}]
  %s1 = inlined_call_operand.vmem [shape: f32[2,18,72], index: 1, kind: input, shape index: {}]
  %s2 = inlined_call_operand.vmem [shape: f32[18,8], index: 2, kind: input, shape index: {}]
  %s3 = inlined_call_operand.vmem [shape: f32[32,72], index: 3, kind: input, shape index: {}]
  %s4 = inlined_call_operand.vmem [shape: f32[432,64], index: 4, kind: input, shape index: {}]
  %s5 = inlined_call_operand.vmem [shape: f32[1,64], index: 5, kind: input, shape index: {}]
  %s6 = inlined_call_operand.vmem [shape: f32[216,64], index: 6, kind: input, shape index: {}]
  %s7 = inlined_call_operand.vmem [shape: f32[1,64], index: 7, kind: input, shape index: {}]
  %s8 = inlined_call_operand.hbm [shape: f32[2,16,64], index: 8, kind: output, shape index: {}]
  %s9 = sld [smem:[#allocation0]]
  $region65: #{tpu_custom_call.1} parent=0
    _
  %s11 = ssub.s32 1, %s9
  %s12 = scalar_select 0, %s11, %s9
  $region1: #{tpu_custom_call.1} parent=0
    #allocation2 [shape = 'u8[16384]{0}', space=vmem, size = 0x4000, scoped, tag = 'output window, operand 0']
    #allocation3 [shape = 's32[2]{0}', space=sflag, size = 0x8, scoped, tag = 'scoped memory for tpu_custom_call.1']
    %13 = vsyncpa [#allocation3], 0
    %s14 = scalar_lea.sflag [#allocation3], 1
    %15 = vsyncpa %s14, 0
    loop: start=0, step=1, limit=4
    $region2: #{tpu_custom_call.1} parent=1 // loop_pre_header
      _
    $region3: #{tpu_custom_call.1} parent=1 // loop_header
      %s17 = sphi 0, %s21
      %p18 = scmp.ge.s32.totalorder %s17, 4
      %s27 = sphi 0, %s29
      %s30 = sphi 0, %s27
      %s31 = sphi 0, %s30
      %s47 = sphi 0, %s31
      %s53 = sphi 0, %s55
      %s56 = sphi 0, %s53
      %s57 = sphi 0, %s56
      %s73 = sphi 0, %s57
      %s77 = sphi 0, %s77
      %s79 = sphi 0, %s77
      %s80 = sphi 0, %s79
      %s94 = sphi 0, %s80
      %s98 = sphi 0, %s98
      %s100 = sphi 0, %s98
      %s101 = sphi 0, %s100
      %s115 = sphi 0, %s101
      %s119 = sphi 0, %s119
      %s121 = sphi 0, %s119
      %s122 = sphi 0, %s121
      %s136 = sphi 0, %s122
      %s140 = sphi 0, %s140
      %s142 = sphi 0, %s140
      %s143 = sphi 0, %s142
      %s157 = sphi 0, %s143
      %s161 = sphi 0, %s161
      %s163 = sphi 0, %s161
      %s164 = sphi 0, %s163
      %s178 = sphi 0, %s164
      %s182 = sphi 0, %s182
      %s184 = sphi 0, %s182
      %s185 = sphi 0, %s184
      %s199 = sphi 0, %s185
      %s205 = sphi 0, %s207
      %s208 = sphi 0, %s205
      %s209 = sphi 0, %s208
      %s225 = sphi 0, %s209
    $region4: #{tpu_custom_call.1} parent=1 // loop_header_branch
      %20 = sbr.rel (%p18) target = $region8
    $region5: #{tpu_custom_call.1} parent=1 // loop_body
      %s22 = ssub.s32 %s17, 1
      %s23 = ssub.s32 %s17, 2
      %s24 = sadd.s32 %s17, 1
      %s25 = ssub.s32 %s17, %s24
      %p26 = scmp.eq.s32.totalorder %s25, 0
      %s28 = sadd.s32 %s27, 1
      %s29 = scalar_select %p26, %s27, %s28
      %p32 = pneg %p26
      %p33 = scmp.eq.s32.totalorder %s17, 1
      %p34 = por %p32, %p33
      %p35 = scmp.ne.s32.totalorder %s27, %s30
      %p36 = scmp.eq.s32.totalorder %s17, 0
      %p37 = por %p35, %p36
      %p38 = scmp.ne.s32.totalorder %s27, %s30
      %p39 = scmp.eq.s32.totalorder %s22, 1
      %p40 = por %p38, %p39
      %p41 = scmp.ne.s32.totalorder %s30, %s31
      %p42 = scmp.eq.s32.totalorder %s22, 0
      %p43 = por %p41, %p42
      %p44 = scmp.ne.s32.totalorder %s30, %s31
      %p45 = scmp.eq.s32.totalorder %s23, 1
      %p46 = por %p44, %p45
      %p48 = scmp.ne.s32.totalorder %s31, %s47
      %p49 = scmp.eq.s32.totalorder %s23, 0
      %p50 = por %p48, %p49
      %s51 = ssub.s32 %s17, %s24
      %p52 = scmp.eq.s32.totalorder %s51, 0
      %s54 = sadd.s32 %s53, 1
      %s55 = scalar_select %p52, %s53, %s54
      %p58 = pneg %p52
      %p59 = scmp.eq.s32.totalorder %s17, 1
      %p60 = por %p58, %p59
      %p61 = scmp.ne.s32.totalorder %s53, %s56
      %p62 = scmp.eq.s32.totalorder %s17, 0
      %p63 = por %p61, %p62
      %p64 = scmp.ne.s32.totalorder %s53, %s56
      %p65 = scmp.eq.s32.totalorder %s22, 1
      %p66 = por %p64, %p65
      %p67 = scmp.ne.s32.totalorder %s56, %s57
      %p68 = scmp.eq.s32.totalorder %s22, 0
      %p69 = por %p67, %p68
      %p70 = scmp.ne.s32.totalorder %s56, %s57
      %p71 = scmp.eq.s32.totalorder %s23, 1
      %p72 = por %p70, %p71
      %p74 = scmp.ne.s32.totalorder %s57, %s73
      %p75 = scmp.eq.s32.totalorder %s23, 0
      %p76 = por %p74, %p75
      %s78 = sadd.s32 %s77, 1
      %p81 = scmp.eq.s32.totalorder %s17, 1
      %p82 = scmp.ne.s32.totalorder %s77, %s79
      %p83 = scmp.eq.s32.totalorder %s17, 0
      %p84 = por %p82, %p83
      %p85 = scmp.ne.s32.totalorder %s77, %s79
      %p86 = scmp.eq.s32.totalorder %s22, 1
      %p87 = por %p85, %p86
      %p88 = scmp.ne.s32.totalorder %s79, %s80
      %p89 = scmp.eq.s32.totalorder %s22, 0
      %p90 = por %p88, %p89
      %p91 = scmp.ne.s32.totalorder %s79, %s80
      %p92 = scmp.eq.s32.totalorder %s23, 1
      %p93 = por %p91, %p92
      %p95 = scmp.ne.s32.totalorder %s80, %s94
      %p96 = scmp.eq.s32.totalorder %s23, 0
      %p97 = por %p95, %p96
      %s99 = sadd.s32 %s98, 1
      %p102 = scmp.eq.s32.totalorder %s17, 1
      %p103 = scmp.ne.s32.totalorder %s98, %s100
      %p104 = scmp.eq.s32.totalorder %s17, 0
      %p105 = por %p103, %p104
      %p106 = scmp.ne.s32.totalorder %s98, %s100
      %p107 = scmp.eq.s32.totalorder %s22, 1
      %p108 = por %p106, %p107
      %p109 = scmp.ne.s32.totalorder %s100, %s101
      %p110 = scmp.eq.s32.totalorder %s22, 0
      %p111 = por %p109, %p110
      %p112 = scmp.ne.s32.totalorder %s100, %s101
      %p113 = scmp.eq.s32.totalorder %s23, 1
      %p114 = por %p112, %p113
      %p116 = scmp.ne.s32.totalorder %s101, %s115
      %p117 = scmp.eq.s32.totalorder %s23, 0
      %p118 = por %p116, %p117
      %s120 = sadd.s32 %s119, 1
      %p123 = scmp.eq.s32.totalorder %s17, 1
      %p124 = scmp.ne.s32.totalorder %s119, %s121
      %p125 = scmp.eq.s32.totalorder %s17, 0
      %p126 = por %p124, %p125
      %p127 = scmp.ne.s32.totalorder %s119, %s121
      %p128 = scmp.eq.s32.totalorder %s22, 1
      %p129 = por %p127, %p128
      %p130 = scmp.ne.s32.totalorder %s121, %s122
      %p131 = scmp.eq.s32.totalorder %s22, 0
      %p132 = por %p130, %p131
      %p133 = scmp.ne.s32.totalorder %s121, %s122
      %p134 = scmp.eq.s32.totalorder %s23, 1
      %p135 = por %p133, %p134
      %p137 = scmp.ne.s32.totalorder %s122, %s136
      %p138 = scmp.eq.s32.totalorder %s23, 0
      %p139 = por %p137, %p138
      %s141 = sadd.s32 %s140, 1
      %p144 = scmp.eq.s32.totalorder %s17, 1
      %p145 = scmp.ne.s32.totalorder %s140, %s142
      %p146 = scmp.eq.s32.totalorder %s17, 0
      %p147 = por %p145, %p146
      %p148 = scmp.ne.s32.totalorder %s140, %s142
      %p149 = scmp.eq.s32.totalorder %s22, 1
      %p150 = por %p148, %p149
      %p151 = scmp.ne.s32.totalorder %s142, %s143
      %p152 = scmp.eq.s32.totalorder %s22, 0
      %p153 = por %p151, %p152
      %p154 = scmp.ne.s32.totalorder %s142, %s143
      %p155 = scmp.eq.s32.totalorder %s23, 1
      %p156 = por %p154, %p155
      %p158 = scmp.ne.s32.totalorder %s143, %s157
      %p159 = scmp.eq.s32.totalorder %s23, 0
      %p160 = por %p158, %p159
      %s162 = sadd.s32 %s161, 1
      %p165 = scmp.eq.s32.totalorder %s17, 1
      %p166 = scmp.ne.s32.totalorder %s161, %s163
      %p167 = scmp.eq.s32.totalorder %s17, 0
      %p168 = por %p166, %p167
      %p169 = scmp.ne.s32.totalorder %s161, %s163
      %p170 = scmp.eq.s32.totalorder %s22, 1
      %p171 = por %p169, %p170
      %p172 = scmp.ne.s32.totalorder %s163, %s164
      %p173 = scmp.eq.s32.totalorder %s22, 0
      %p174 = por %p172, %p173
      %p175 = scmp.ne.s32.totalorder %s163, %s164
      %p176 = scmp.eq.s32.totalorder %s23, 1
      %p177 = por %p175, %p176
      %p179 = scmp.ne.s32.totalorder %s164, %s178
      %p180 = scmp.eq.s32.totalorder %s23, 0
      %p181 = por %p179, %p180
      %s183 = sadd.s32 %s182, 1
      %p186 = scmp.eq.s32.totalorder %s17, 1
      %p187 = scmp.ne.s32.totalorder %s182, %s184
      %p188 = scmp.eq.s32.totalorder %s17, 0
      %p189 = por %p187, %p188
      %p190 = scmp.ne.s32.totalorder %s182, %s184
      %p191 = scmp.eq.s32.totalorder %s22, 1
      %p192 = por %p190, %p191
      %p193 = scmp.ne.s32.totalorder %s184, %s185
      %p194 = scmp.eq.s32.totalorder %s22, 0
      %p195 = por %p193, %p194
      %p196 = scmp.ne.s32.totalorder %s184, %s185
      %p197 = scmp.eq.s32.totalorder %s23, 1
      %p198 = por %p196, %p197
      %p200 = scmp.ne.s32.totalorder %s185, %s199
      %p201 = scmp.eq.s32.totalorder %s23, 0
      %p202 = por %p200, %p201
      %s203 = ssub.s32 %s17, %s24
      %p204 = scmp.eq.s32.totalorder %s203, 0
      %s206 = sadd.s32 %s205, 1
      %s207 = scalar_select %p204, %s205, %s206
      %p210 = pneg %p204
      %p211 = scmp.eq.s32.totalorder %s17, 1
      %p212 = por %p210, %p211
      %p213 = scmp.ne.s32.totalorder %s205, %s208
      %p214 = scmp.eq.s32.totalorder %s17, 0
      %p215 = por %p213, %p214
      %p216 = scmp.ne.s32.totalorder %s205, %s208
      %p217 = scmp.eq.s32.totalorder %s22, 1
      %p218 = por %p216, %p217
      %p219 = scmp.ne.s32.totalorder %s208, %s209
      %p220 = scmp.eq.s32.totalorder %s22, 0
      %p221 = por %p219, %p220
      %p222 = scmp.ne.s32.totalorder %s208, %s209
      %p223 = scmp.eq.s32.totalorder %s23, 1
      %p224 = por %p222, %p223
      %p226 = scmp.ne.s32.totalorder %s209, %s225
      %p227 = scmp.eq.s32.totalorder %s23, 0
      %p228 = por %p226, %p227
      %p229 = scmp.le.s32.totalorder 1, %s17
      %p230 = scmp.lt.s32.totalorder %s17, 3
      %p231 = pnand %p229, %p230
      %p232 = pneg %p231
      // Predicated region
      $region9: #{tpu_custom_call.1} parent=5 // pred_check
        _
      $region10: #{tpu_custom_call.1} parent=5 // pred_check_branch
        %234 = sbr.rel (%p231) target = $region12
      $region11: #{tpu_custom_call.1} parent=5 // pred_region
        %s235 = ssub.s32 %s17, 1
        // Predicated region
        $region13: #{tpu_custom_call.1} parent=11 // pred_check
          %p236 = pneg %p90
        $region14: #{tpu_custom_call.1} parent=11 // pred_check_branch
          %238 = sbr.rel (%p236) target = $region16
        $region15: #{tpu_custom_call.1} parent=11 // pred_region
          _
        $region16: #{tpu_custom_call.1} parent=11 // pred_fallthru
          _
        // Predicated region
        $region17: #{tpu_custom_call.1} parent=11 // pred_check
          %p239 = pneg %p111
        $region18: #{tpu_custom_call.1} parent=11 // pred_check_branch
          %241 = sbr.rel (%p239) target = $region20
        $region19: #{tpu_custom_call.1} parent=11 // pred_region
          _
        $region20: #{tpu_custom_call.1} parent=11 // pred_fallthru
          _
        // Predicated region
        $region21: #{tpu_custom_call.1} parent=11 // pred_check
          %p242 = pneg %p132
        $region22: #{tpu_custom_call.1} parent=11 // pred_check_branch
          %244 = sbr.rel (%p242) target = $region24
        $region23: #{tpu_custom_call.1} parent=11 // pred_region
          _
        $region24: #{tpu_custom_call.1} parent=11 // pred_fallthru
          _
        // Predicated region
        $region25: #{tpu_custom_call.1} parent=11 // pred_check
          %p245 = pneg %p153
        $region26: #{tpu_custom_call.1} parent=11 // pred_check_branch
          %247 = sbr.rel (%p245) target = $region28
        $region27: #{tpu_custom_call.1} parent=11 // pred_region
          _
        $region28: #{tpu_custom_call.1} parent=11 // pred_fallthru
          _
        // Predicated region
        $region29: #{tpu_custom_call.1} parent=11 // pred_check
          %p248 = pneg %p174
        $region30: #{tpu_custom_call.1} parent=11 // pred_check_branch
          %250 = sbr.rel (%p248) target = $region32
        $region31: #{tpu_custom_call.1} parent=11 // pred_region
          _
        $region32: #{tpu_custom_call.1} parent=11 // pred_fallthru
          _
        // Predicated region
        $region33: #{tpu_custom_call.1} parent=11 // pred_check
          %p251 = pneg %p195
        $region34: #{tpu_custom_call.1} parent=11 // pred_check_branch
          %253 = sbr.rel (%p251) target = $region36
        $region35: #{tpu_custom_call.1} parent=11 // pred_region
          _
        $region36: #{tpu_custom_call.1} parent=11 // pred_fallthru
          _
      $region12: #{tpu_custom_call.1} parent=5 // pred_fallthru
        _
      %p254 = scmp.lt.s32.totalorder %s17, 2
      // Predicated region
      $region37: #{tpu_custom_call.1} parent=5 // pred_check
        %p255 = pneg %p254
      $region38: #{tpu_custom_call.1} parent=5 // pred_check_branch
        %257 = sbr.rel (%p255) target = $region40
      $region39: #{tpu_custom_call.1} parent=5 // pred_region
        // Predicated region
        $region41: #{tpu_custom_call.1} parent=39 // pred_check
          %p258 = pneg %p37
        $region42: #{tpu_custom_call.1} parent=39 // pred_check_branch
          %260 = sbr.rel (%p258) target = $region44
        $region43: #{tpu_custom_call.1} parent=39 // pred_region
          %p261 = scmp.lt.s32.totalorder %s17, 1
          %s262 = scalar_select %p261, %s17, 1
          %s263 = smul.addr %s262, 8
          %s264 = scalar_lea.vmem %s0, %s263
        $region44: #{tpu_custom_call.1} parent=39 // pred_fallthru
          _
        // Predicated region
        $region45: #{tpu_custom_call.1} parent=39 // pred_check
          %p265 = pneg %p63
        $region46: #{tpu_custom_call.1} parent=39 // pred_check_branch
          %267 = sbr.rel (%p265) target = $region48
        $region47: #{tpu_custom_call.1} parent=39 // pred_region
          %p268 = scmp.lt.s32.totalorder %s17, 1
          %s269 = scalar_select %p268, %s17, 1
          %s270 = smul.addr %s269, 3
          %s271 = smul.addr %s270, 8
          %s272 = scalar_lea.vmem %s1, %s271
        $region48: #{tpu_custom_call.1} parent=39 // pred_fallthru
          _
      $region40: #{tpu_custom_call.1} parent=5 // pred_fallthru
        _
      %p273 = scmp.le.s32.totalorder 1, %s17
      %p274 = scmp.lt.s32.totalorder %s17, 3
      %p275 = pnand %p273, %p274
      %p276 = pneg %p275
      // Predicated region
      $region49: #{tpu_custom_call.1} parent=5 // pred_check
        _
      $region50: #{tpu_custom_call.1} parent=5 // pred_check_branch
        %278 = sbr.rel (%p275) target = $region52
      $region51: #{tpu_custom_call.1} parent=5 // pred_region
        %s279 = ssub.s32 %s17, 1
        %p280 = scmp.lt.s32.totalorder %s22, 1
        %s281 = scalar_select %p280, %s22, 1
        %s282 = smul.addr %s281, 8
        %s283 = scalar_lea.vmem %s0, %s282
        %p284 = pneg %p43
        %p285 = pneg %p40
        %p286 = scmp.lt.s32.totalorder %s22, 1
        %s287 = scalar_select %p286, %s22, 1
        %s288 = smul.addr %s287, 3
        %s289 = smul.addr %s288, 8
        %s290 = scalar_lea.vmem %s1, %s289
        %p291 = pneg %p69
        %p292 = pneg %p66
        %p293 = pneg %p90
        %p294 = pneg %p87
        %p295 = pneg %p111
        %p296 = pneg %p108
        %p297 = pneg %p132
        %p298 = pneg %p129
        %p299 = pneg %p153
        %p300 = pneg %p150
        %p301 = pneg %p174
        %p302 = pneg %p171
        %p303 = pneg %p195
        %p304 = pneg %p192
        %p305 = pneg %p221
        %p306 = pneg %p218
        %s307 = sand.u32 %s208, 1
        %s308 = scalar_lea.sflag [#allocation3], %s307
        %s309 = sand.u32 %s208, 1
        %s310 = smul.addr %s309, 16
        %s311 = scalar_lea.vmem [#allocation2], %s310
        %p312 = scmp.lt.s32.totalorder %s22, 1
        %s313 = scalar_select %p312, %s22, 1
        %s314 = smul.addr %s313, 8
        %s315 = scalar_lea.vmem %s0, %s314
        %p316 = scmp.lt.s32.totalorder %s22, 1
        %s317 = scalar_select %p316, %s22, 1
        %s318 = smul.addr %s317, 3
        %s319 = smul.addr %s318, 8
        %s320 = scalar_lea.vmem %s1, %s319
        %v321 = vld [vmem:[%s2] sm:$0xff]
        %v322 = vld [vmem:[%s2 + $0x8] sm:$0xff]
        %v323 = vld [vmem:[%s2 + $0x10] sm:$0x3]
        %v324 = vld [vmem:[%s315] sm:$0xff]
        %vm325 = vcmask 64512
        %v327 = vsel %vm325, %v321, 0
        %v330 = vsel %vm325, %v322, 0
        %v333 = vsel %vm325, %v323, 0
        %335 = vmatprep.subr.mxu0 0.0
        %336 = vmatpush1.msra.mxu0 %v324
        %337 = vmatprep.subr.mxu0 0.0
        %338 = vmatpush1.msra.mxu0 0.0
        %339 = vmatprep.subr.mxu0 0.0
        %340 = vmatpush1.msra.mxu0 0.0
        %341 = vmatprep.subr.mxu0 0.0
        %342 = vmatpush1.msra.mxu0 0.0
        %343 = vmatprep.subr.mxu0 0.0
        %344 = vmatpush1.msra.mxu0 0.0
        %345 = vmatprep.subr.mxu0 0.0
        %346 = vmatpush1.msra.mxu0 0.0
        %347 = vmatprep.subr.mxu0 0.0
        %348 = vmatpush1.msra.mxu0 0.0
        %349 = vmatprep.subr.mxu0 0.0
        %350 = vmatpush1.msra.mxu0 0.0
        %351 = vmatprep.subr.mxu0 0.0
        %352 = vmatpush1.msra.mxu0 0.0
        %353 = vmatprep.subr.mxu0 0.0
        %354 = vmatpush1.msra.mxu0 0.0
        %355 = vmatprep.subr.mxu0 0.0
        %356 = vmatpush1.msra.mxu0 0.0
        %357 = vmatprep.subr.mxu0 0.0
        %358 = vmatpush1.msra.mxu0 0.0
        %359 = vmatprep.subr.mxu0 0.0
        %360 = vmatpush1.msra.mxu0 0.0
        %361 = vmatprep.subr.mxu0 0.0
        %362 = vmatpush1.msra.mxu0 0.0
        %363 = vmatprep.subr.mxu0 0.0
        %364 = vmatpush1.msra.mxu0 0.0
        %365 = vmatprep.subr.mxu0 0.0
        %366 = vmatpush1.msra.mxu0 0.0
        %367 = vmatprep.subr.mxu0 0.0
        %368 = vmatpush1.msra.mxu0 0.0
        %369 = vmatprep.subr.mxu0 0.0
        %370 = vmatpush1.msra.mxu0 0.0
        %371 = vmatprep.subr.mxu0 0.0
        %372 = vmatpush1.msra.mxu0 0.0
        %373 = vmatprep.subr.mxu0 0.0
        %374 = vmatpush1.msra.mxu0 0.0
        %375 = vmatprep.subr.mxu0 0.0
        %376 = vmatpush1.msra.mxu0 0.0
        %377 = vmatprep.subr.mxu0 0.0
        %378 = vmatpush1.msra.mxu0 0.0
        %379 = vmatprep.subr.mxu0 0.0
        %380 = vmatpush1.msra.mxu0 0.0
        %381 = vmatprep.subr.mxu0 0.0
        %382 = vmatpush1.msra.mxu0 0.0
        %383 = vmatprep.subr.mxu0 0.0
        %384 = vmatpush1.msra.mxu0 0.0
        %385 = vmatprep.subr.mxu0 0.0
        %386 = vmatpush1.msra.mxu0 0.0
        %387 = vmatprep.subr.mxu0 0.0
        %388 = vmatpush1.msra.mxu0 0.0
        %389 = vmatprep.subr.mxu0 0.0
        %390 = vmatpush1.msra.mxu0 0.0
        %391 = vmatprep.subr.mxu0 0.0
        %392 = vmatpush1.msra.mxu0 0.0
        %393 = vmatprep.subr.mxu0 0.0
        %394 = vmatpush1.msra.mxu0 0.0
        %395 = vmatprep.subr.mxu0 0.0
        %396 = vmatpush1.msra.mxu0 0.0
        %397 = vmatprep.subr.mxu0 0.0
        %398 = vmatpush1.msra.mxu0 0.0
        %399 = vmatprep.mubr.f32.mxu0 0.0
        %400 = vmatmul.mubr.f32.gmra.mrb[0].mxu0 %v327
        %v401 = vpop.f32.mrb[0].mxu0
        %v402 = vadd.f32 0.0, %v401
        %v403 = vpop.f32.mrb[0].mxu0
        %404 = vmatprep.mubr.f32.mxu0 0.0
        %405 = vmatmul.mubr.f32.gmra.mrb[0].mxu0 %v330
        %v406 = vpop.f32.mrb[0].mxu0
        %v407 = vadd.f32 0.0, %v406
        %v408 = vpop.f32.mrb[0].mxu0
        %409 = vmatprep.mubr.f32.mxu0 0.0
        %410 = vmatmul.mubr.f32.gmra.mrb[0].mxu0 %v333
        %v411 = vpop.f32.mrb[0].mxu0
        %v412 = vadd.f32 0.0, %v411
        %v413 = vpop.f32.mrb[0].mxu0
        %414 = vdwg.mxu0
        %v415 = vld [vmem:[%s3] sm:$0xff]
        %v416 = vld [vmem:[%s3 + $0x8] sm:$0xff]
        %v417 = vld [vmem:[%s3 + $0x10] sm:$0xff]
        %v418 = vld [vmem:[%s3 + $0x18] sm:$0xff]
        %vm419 = vcmask 261120
        %v421 = vsel %vm419, %v402, 0
        %v424 = vsel %vm419, %v407, 0
        %v427 = vsel %vm419, %v412, 0
        %429 = vmatprep.subr.mxu0 0.0
        %430 = vmatpush1.msra.mxu0 %v415
        %431 = vmatprep.subr.mxu0 0.0
        %432 = vmatpush1.msra.mxu0 %v416
        %433 = vmatprep.subr.mxu0 0.0
        %434 = vmatpush1.msra.mxu0 %v417
        %435 = vmatprep.subr.mxu0 0.0
        %436 = vmatpush1.msra.mxu0 %v418
        %437 = vmatprep.subr.mxu0 0.0
        %438 = vmatpush1.msra.mxu0 0.0
        %439 = vmatprep.subr.mxu0 0.0
        %440 = vmatpush1.msra.mxu0 0.0
        %441 = vmatprep.subr.mxu0 0.0
        %442 = vmatpush1.msra.mxu0 0.0
        %443 = vmatprep.subr.mxu0 0.0
        %444 = vmatpush1.msra.mxu0 0.0
        %445 = vmatprep.subr.mxu0 0.0
        %446 = vmatpush1.msra.mxu0 0.0
        %447 = vmatprep.subr.mxu0 0.0
        %448 = vmatpush1.msra.mxu0 0.0
        %449 = vmatprep.subr.mxu0 0.0
        %450 = vmatpush1.msra.mxu0 0.0
        %451 = vmatprep.subr.mxu0 0.0
        %452 = vmatpush1.msra.mxu0 0.0
        %453 = vmatprep.subr.mxu0 0.0
        %454 = vmatpush1.msra.mxu0 0.0
        %455 = vmatprep.subr.mxu0 0.0
        %456 = vmatpush1.msra.mxu0 0.0
        %457 = vmatprep.subr.mxu0 0.0
        %458 = vmatpush1.msra.mxu0 0.0
        %459 = vmatprep.subr.mxu0 0.0
        %460 = vmatpush1.msra.mxu0 0.0
        %461 = vmatprep.subr.mxu0 0.0
        %462 = vmatpush1.msra.mxu0 0.0
        %463 = vmatprep.subr.mxu0 0.0
        %464 = vmatpush1.msra.mxu0 0.0
        %465 = vmatprep.subr.mxu0 0.0
        %466 = vmatpush1.msra.mxu0 0.0
        %467 = vmatprep.subr.mxu0 0.0
        %468 = vmatpush1.msra.mxu0 0.0
        %469 = vmatprep.subr.mxu0 0.0
        %470 = vmatpush1.msra.mxu0 0.0
        %471 = vmatprep.subr.mxu0 0.0
        %472 = vmatpush1.msra.mxu0 0.0
        %473 = vmatprep.subr.mxu0 0.0
        %474 = vmatpush1.msra.mxu0 0.0
        %475 = vmatprep.subr.mxu0 0.0
        %476 = vmatpush1.msra.mxu0 0.0
        %477 = vmatprep.subr.mxu0 0.0
        %478 = vmatpush1.msra.mxu0 0.0
        %479 = vmatprep.subr.mxu0 0.0
        %480 = vmatpush1.msra.mxu0 0.0
        %481 = vmatprep.subr.mxu0 0.0
        %482 = vmatpush1.msra.mxu0 0.0
        %483 = vmatprep.subr.mxu0 0.0
        %484 = vmatpush1.msra.mxu0 0.0
        %485 = vmatprep.subr.mxu0 0.0
        %486 = vmatpush1.msra.mxu0 0.0
        %487 = vmatprep.subr.mxu0 0.0
        %488 = vmatpush1.msra.mxu0 0.0
        %489 = vmatprep.subr.mxu0 0.0
        %490 = vmatpush1.msra.mxu0 0.0
        %491 = vmatprep.subr.mxu0 0.0
        %492 = vmatpush1.msra.mxu0 0.0
        %493 = vmatprep.mubr.f32.mxu0 0.0
        %494 = vmatmul.mubr.f32.gmra.mrb[0].mxu0 %v421
        %v495 = vpop.f32.mrb[0].mxu0
        %v496 = vadd.f32 0.0, %v495
        %v497 = vpop.f32.mrb[0].mxu0
        %498 = vmatprep.mubr.f32.mxu0 0.0
        %499 = vmatmul.mubr.f32.gmra.mrb[0].mxu0 %v424
        %v500 = vpop.f32.mrb[0].mxu0
        %v501 = vadd.f32 0.0, %v500
        %v502 = vpop.f32.mrb[0].mxu0
        %503 = vmatprep.mubr.f32.mxu0 0.0
        %504 = vmatmul.mubr.f32.gmra.mrb[0].mxu0 %v427
        %v505 = vpop.f32.mrb[0].mxu0
        %v506 = vadd.f32 0.0, %v505
        %v507 = vpop.f32.mrb[0].mxu0
        %508 = vdwg.mxu0
        %v509 = vld [vmem:[%s320] sm:$0xff]
        %v510 = vld [vmem:[%s320 + $0x8] sm:$0xff]
        %v511 = vld [vmem:[%s320 + $0x10] sm:$0x3]
        %vm515 = vcmask 1046528
        %v516 = vrot.slane %v509, 1
        %v517 = vrot.slane %v510, 1
        %v518 = vsel %vm515, %v516, %v517
        %v519 = vrot.slane %v511, 1
        %v520 = vsel %vm515, %v517, %v519
        %521 = vrot.lane.b32.xlu0 %v518, 72
        %v522 = vpop.permute.xlu0 %521
        %523 = vrot.lane.b32.xlu0 %v520, 72
        %v524 = vpop.permute.xlu0 %523
        %vm527 = vcmask 1045504
        %v528 = vrot.slane %v509, 2
        %v529 = vrot.slane %v510, 2
        %v530 = vsel %vm527, %v528, %v529
        %v531 = vrot.slane %v511, 2
        %v532 = vsel %vm527, %v529, %v531
        %533 = vrot.lane.b32.xlu0 %v530, 16
        %v534 = vpop.permute.xlu0 %533
        %535 = vrot.lane.b32.xlu0 %v532, 16
        %v536 = vpop.permute.xlu0 %535
        %541 = vrot.lane.b32.xlu0 %v496, 88
        %v542 = vpop.permute.xlu0 %541
        %543 = vrot.lane.b32.xlu0 %v501, 88
        %v544 = vpop.permute.xlu0 %543
        %v548 = vrot.slane %v496, 1
        %v549 = vrot.slane %v501, 1
        %v550 = vsel %vm515, %v548, %v549
        %v551 = vrot.slane %v506, 1
        %v552 = vsel %vm515, %v549, %v551
        %553 = vrot.lane.b32.xlu0 %v550, 32
        %v554 = vpop.permute.xlu0 %553
        %555 = vrot.lane.b32.xlu0 %v552, 32
        %v556 = vpop.permute.xlu0 %555
        %v559 = vrot.slane %v496, 2
        %v560 = vrot.slane %v501, 2
        %v561 = vsel %vm527, %v559, %v560
        %v562 = vrot.slane %v506, 2
        %v563 = vsel %vm527, %v560, %v562
        %564 = vrot.lane.b32.xlu0 %v561, 104
        %v565 = vpop.permute.xlu0 %564
        %566 = vrot.lane.b32.xlu0 %v563, 104
        %v567 = vpop.permute.xlu0 %566
        %vm570 = vcmask 588800
        %v571 = vsel %vm570, %v509, %v522
        %v572 = vsel %vm570, %v510, %v524
        %vm573 = vcmask 130048
        %v574 = vsel %vm573, %v522, %v534
        %v575 = vsel %vm573, %v524, %v536
        %vm576 = vcmask 719872
        %v577 = vsel %vm576, %v574, %v542
        %v578 = vsel %vm576, %v575, %v544
        %v579 = vsel %vm419, %v542, %v554
        %v580 = vsel %vm419, %v544, %v556
        %vm581 = vcmask 850944
        %v582 = vsel %vm581, %v579, %v565
        %v583 = vsel %vm581, %v580, %v567
        %v584 = vld [vmem:[%s4] sm:$0xff]
        %v585 = vld [vmem:[%s4 + $0x8] sm:$0xff]
        %v586 = vld [vmem:[%s4 + $0x10] sm:$0xff]
        %v587 = vld [vmem:[%s4 + $0x18] sm:$0xff]
        %v588 = vld [vmem:[%s4 + $0x20] sm:$0xff]
        %v589 = vld [vmem:[%s4 + $0x28] sm:$0xff]
        %v590 = vld [vmem:[%s4 + $0x30] sm:$0xff]
        %v591 = vld [vmem:[%s4 + $0x38] sm:$0xff]
        %v592 = vld [vmem:[%s4 + $0x40] sm:$0xff]
        %v593 = vld [vmem:[%s4 + $0x48] sm:$0xff]
        %v594 = vld [vmem:[%s4 + $0x50] sm:$0xff]
        %v595 = vld [vmem:[%s4 + $0x58] sm:$0xff]
        %v596 = vld [vmem:[%s4 + $0x60] sm:$0xff]
        %v597 = vld [vmem:[%s4 + $0x68] sm:$0xff]
        %v598 = vld [vmem:[%s4 + $0x70] sm:$0xff]
        %v599 = vld [vmem:[%s4 + $0x78] sm:$0xff]
        %v600 = vld [vmem:[%s4 + $0x80] sm:$0xff]
        %v601 = vld [vmem:[%s4 + $0x88] sm:$0xff]
        %v602 = vld [vmem:[%s4 + $0x90] sm:$0xff]
        %v603 = vld [vmem:[%s4 + $0x98] sm:$0xff]
        %v604 = vld [vmem:[%s4 + $0xa0] sm:$0xff]
        %v605 = vld [vmem:[%s4 + $0xa8] sm:$0xff]
        %v606 = vld [vmem:[%s4 + $0xb0] sm:$0xff]
        %v607 = vld [vmem:[%s4 + $0xb8] sm:$0xff]
        %v608 = vld [vmem:[%s4 + $0xc0] sm:$0xff]
        %v609 = vld [vmem:[%s4 + $0xc8] sm:$0xff]
        %v610 = vld [vmem:[%s4 + $0xd0] sm:$0xff]
        %v611 = vld [vmem:[%s4 + $0xd8] sm:$0xff]
        %v612 = vld [vmem:[%s4 + $0xe0] sm:$0xff]
        %v613 = vld [vmem:[%s4 + $0xe8] sm:$0xff]
        %v614 = vld [vmem:[%s4 + $0xf0] sm:$0xff]
        %v615 = vld [vmem:[%s4 + $0xf8] sm:$0xff]
        %v616 = vld [vmem:[%s4 + $0x100] sm:$0xff]
        %v617 = vld [vmem:[%s4 + $0x108] sm:$0xff]
        %v618 = vld [vmem:[%s4 + $0x110] sm:$0xff]
        %v619 = vld [vmem:[%s4 + $0x118] sm:$0xff]
        %v620 = vld [vmem:[%s4 + $0x120] sm:$0xff]
        %v621 = vld [vmem:[%s4 + $0x128] sm:$0xff]
        %v622 = vld [vmem:[%s4 + $0x130] sm:$0xff]
        %v623 = vld [vmem:[%s4 + $0x138] sm:$0xff]
        %v624 = vld [vmem:[%s4 + $0x140] sm:$0xff]
        %v625 = vld [vmem:[%s4 + $0x148] sm:$0xff]
        %v626 = vld [vmem:[%s4 + $0x150] sm:$0xff]
        %v627 = vld [vmem:[%s4 + $0x158] sm:$0xff]
        %v628 = vld [vmem:[%s4 + $0x160] sm:$0xff]
        %v629 = vld [vmem:[%s4 + $0x168] sm:$0xff]
        %v630 = vld [vmem:[%s4 + $0x170] sm:$0xff]
        %v631 = vld [vmem:[%s4 + $0x178] sm:$0xff]
        %v632 = vld [vmem:[%s4 + $0x180] sm:$0xff]
        %v633 = vld [vmem:[%s4 + $0x188] sm:$0xff]
        %v634 = vld [vmem:[%s4 + $0x190] sm:$0xff]
        %v635 = vld [vmem:[%s4 + $0x198] sm:$0xff]
        %v636 = vld [vmem:[%s4 + $0x1a0] sm:$0xff]
        %v637 = vld [vmem:[%s4 + $0x1a8] sm:$0xff]
        %v638 = vld [vmem:[%s5] sm:$0x1]
        %v640 = vlaneseq
        %v641 = vshrl.u32 %v640, 7
        %v642 = vsub.s32 0, %v641
        %v643 = vrot.slane %v638, %v642
        %vm645 = vcmask 392192
        %v646 = vsel %vm645, %v565, 0
        %v648 = vsel %vm645, %v567, 0
        %650 = vmatprep.subr.mxu0 0.0
        %651 = vmatpush1.msra.mxu0 %v584
        %652 = vmatprep.subr.mxu0 0.0
        %653 = vmatpush1.msra.mxu0 %v585
        %654 = vmatprep.subr.mxu0 0.0
        %655 = vmatpush1.msra.mxu0 %v586
        %656 = vmatprep.subr.mxu0 0.0
        %657 = vmatpush1.msra.mxu0 %v587
        %658 = vmatprep.subr.mxu0 0.0
        %659 = vmatpush1.msra.mxu0 %v588
        %660 = vmatprep.subr.mxu0 0.0
        %661 = vmatpush1.msra.mxu0 %v589
        %662 = vmatprep.subr.mxu0 0.0
        %663 = vmatpush1.msra.mxu0 %v590
        %664 = vmatprep.subr.mxu0 0.0
        %665 = vmatpush1.msra.mxu0 %v591
        %666 = vmatprep.subr.mxu0 0.0
        %667 = vmatpush1.msra.mxu0 %v592
        %668 = vmatprep.subr.mxu0 0.0
        %669 = vmatpush1.msra.mxu0 %v593
        %670 = vmatprep.subr.mxu0 0.0
        %671 = vmatpush1.msra.mxu0 %v594
        %672 = vmatprep.subr.mxu0 0.0
        %673 = vmatpush1.msra.mxu0 %v595
        %674 = vmatprep.subr.mxu0 0.0
        %675 = vmatpush1.msra.mxu0 %v596
        %676 = vmatprep.subr.mxu0 0.0
        %677 = vmatpush1.msra.mxu0 %v597
        %678 = vmatprep.subr.mxu0 0.0
        %679 = vmatpush1.msra.mxu0 %v598
        %680 = vmatprep.subr.mxu0 0.0
        %681 = vmatpush1.msra.mxu0 %v599
        %682 = vmatprep.subr.mxu0 0.0
        %683 = vmatpush1.msra.mxu0 %v600
        %684 = vmatprep.subr.mxu0 0.0
        %685 = vmatpush1.msra.mxu0 %v601
        %686 = vmatprep.subr.mxu0 0.0
        %687 = vmatpush1.msra.mxu0 %v602
        %688 = vmatprep.subr.mxu0 0.0
        %689 = vmatpush1.msra.mxu0 %v603
        %690 = vmatprep.subr.mxu0 0.0
        %691 = vmatpush1.msra.mxu0 %v604
        %692 = vmatprep.subr.mxu0 0.0
        %693 = vmatpush1.msra.mxu0 %v605
        %694 = vmatprep.subr.mxu0 0.0
        %695 = vmatpush1.msra.mxu0 %v606
        %696 = vmatprep.subr.mxu0 0.0
        %697 = vmatpush1.msra.mxu0 %v607
        %698 = vmatprep.subr.mxu0 0.0
        %699 = vmatpush1.msra.mxu0 %v608
        %700 = vmatprep.subr.mxu0 0.0
        %701 = vmatpush1.msra.mxu0 %v609
        %702 = vmatprep.subr.mxu0 0.0
        %703 = vmatpush1.msra.mxu0 %v610
        %704 = vmatprep.subr.mxu0 0.0
        %705 = vmatpush1.msra.mxu0 %v611
        %706 = vmatprep.subr.mxu0 0.0
        %707 = vmatpush1.msra.mxu0 %v612
        %708 = vmatprep.subr.mxu0 0.0
        %709 = vmatpush1.msra.mxu0 %v613
        %710 = vmatprep.subr.mxu0 0.0
        %711 = vmatpush1.msra.mxu0 %v614
        %712 = vmatprep.subr.mxu0 0.0
        %713 = vmatpush1.msra.mxu0 %v615
        %714 = vmatprep.mubr.f32.mxu0 %v577
        %715 = vmatmul.mubr.f32.gmra.mrb[0].mxu0 %v571
        %v716 = vpop.f32.mrb[0].mxu0
        %v717 = vadd.f32 %v643, %v716
        %v718 = vpop.f32.mrb[0].mxu0
        %719 = vmatprep.mubr.f32.mxu0 %v578
        %720 = vmatmul.mubr.f32.gmra.mrb[0].mxu0 %v572
        %v721 = vpop.f32.mrb[0].mxu0
        %v722 = vadd.f32 %v643, %v721
        %v723 = vpop.f32.mrb[0].mxu0
        %724 = vdwg.mxu0
        %725 = vmatprep.subr.mxu0 0.0
        %726 = vmatpush1.msra.mxu0 %v616
        %727 = vmatprep.subr.mxu0 0.0
        %728 = vmatpush1.msra.mxu0 %v617
        %729 = vmatprep.subr.mxu0 0.0
        %730 = vmatpush1.msra.mxu0 %v618
        %731 = vmatprep.subr.mxu0 0.0
        %732 = vmatpush1.msra.mxu0 %v619
        %733 = vmatprep.subr.mxu0 0.0
        %734 = vmatpush1.msra.mxu0 %v620
        %735 = vmatprep.subr.mxu0 0.0
        %736 = vmatpush1.msra.mxu0 %v621
        %737 = vmatprep.subr.mxu0 0.0
        %738 = vmatpush1.msra.mxu0 %v622
        %739 = vmatprep.subr.mxu0 0.0
        %740 = vmatpush1.msra.mxu0 %v623
        %741 = vmatprep.subr.mxu0 0.0
        %742 = vmatpush1.msra.mxu0 %v624
        %743 = vmatprep.subr.mxu0 0.0
        %744 = vmatpush1.msra.mxu0 %v625
        %745 = vmatprep.subr.mxu0 0.0
        %746 = vmatpush1.msra.mxu0 %v626
        %747 = vmatprep.subr.mxu0 0.0
        %748 = vmatpush1.msra.mxu0 %v627
        %749 = vmatprep.subr.mxu0 0.0
        %750 = vmatpush1.msra.mxu0 %v628
        %751 = vmatprep.subr.mxu0 0.0
        %752 = vmatpush1.msra.mxu0 %v629
        %753 = vmatprep.subr.mxu0 0.0
        %754 = vmatpush1.msra.mxu0 %v630
        %755 = vmatprep.subr.mxu0 0.0
        %756 = vmatpush1.msra.mxu0 %v631
        %757 = vmatprep.subr.mxu0 0.0
        %758 = vmatpush1.msra.mxu0 %v632
        %759 = vmatprep.subr.mxu0 0.0
        %760 = vmatpush1.msra.mxu0 %v633
        %761 = vmatprep.subr.mxu0 0.0
        %762 = vmatpush1.msra.mxu0 %v634
        %763 = vmatprep.subr.mxu0 0.0
        %764 = vmatpush1.msra.mxu0 %v635
        %765 = vmatprep.subr.mxu0 0.0
        %766 = vmatpush1.msra.mxu0 %v636
        %767 = vmatprep.subr.mxu0 0.0
        %768 = vmatpush1.msra.mxu0 %v637
        %769 = vmatprep.subr.mxu0 0.0
        %770 = vmatpush1.msra.mxu0 0.0
        %771 = vmatprep.subr.mxu0 0.0
        %772 = vmatpush1.msra.mxu0 0.0
        %773 = vmatprep.subr.mxu0 0.0
        %774 = vmatpush1.msra.mxu0 0.0
        %775 = vmatprep.subr.mxu0 0.0
        %776 = vmatpush1.msra.mxu0 0.0
        %777 = vmatprep.subr.mxu0 0.0
        %778 = vmatpush1.msra.mxu0 0.0
        %779 = vmatprep.subr.mxu0 0.0
        %780 = vmatpush1.msra.mxu0 0.0
        %781 = vmatprep.subr.mxu0 0.0
        %782 = vmatpush1.msra.mxu0 0.0
        %783 = vmatprep.subr.mxu0 0.0
        %784 = vmatpush1.msra.mxu0 0.0
        %785 = vmatprep.subr.mxu0 0.0
        %786 = vmatpush1.msra.mxu0 0.0
        %787 = vmatprep.subr.mxu0 0.0
        %788 = vmatpush1.msra.mxu0 0.0
        %789 = vmatprep.mubr.f32.mxu0 %v646
        %790 = vmatmul.mubr.f32.gmra.mrb[0].mxu0 %v582
        %v791 = vpop.f32.mrb[0].mxu0
        %v792 = vadd.f32 %v717, %v791
        %v793 = vpop.f32.mrb[0].mxu0
        %794 = vmatprep.mubr.f32.mxu0 %v648
        %795 = vmatmul.mubr.f32.gmra.mrb[0].mxu0 %v583
        %v796 = vpop.f32.mrb[0].mxu0
        %v797 = vadd.f32 %v722, %v796
        %v798 = vpop.f32.mrb[0].mxu0
        %799 = vdwg.mxu0
        %v800 = vmax.f32 %v792, 0.0
        %v801 = vmax.f32 %v797, 0.0
        %804 = vrot.lane.b32.xlu0 %v800, 4
        %v805 = vpop.permute.xlu0 %804
        %806 = vrot.lane.b32.xlu0 %v801, 4
        %v807 = vpop.permute.xlu0 %806
        %vm810 = vcmask 31744
        %v811 = vsel %vm810, 0.0, %v805
        %v812 = vsel %vm810, 0.0, %v807
        %vm813 = vcmask 556032
        %v814 = vsel %vm813, %v811, 0.0
        %v815 = vsel %vm813, %v812, 0.0
        %vm818 = vcmask 1040384
        %v819 = vrot.slane %v814, 7
        %v820 = vrot.slane %v815, 7
        %v821 = vsel %vm818, %v819, %v820
        %v825 = vsel %vm818, 0.0, %v819
        %v826 = vsel %vm818, %v820, 0.0
        %v829 = vrot.slane %v825, 1
        %v830 = vrot.slane %v821, 1
        %v831 = vsel %vm515, %v829, %v830
        %v832 = vrot.slane %v826, 1
        %v833 = vsel %vm515, %v830, %v832
        %834 = vrot.lane.b32.xlu0 %v831, 72
        %v835 = vpop.permute.xlu0 %834
        %836 = vrot.lane.b32.xlu0 %v833, 72
        %v837 = vpop.permute.xlu0 %836
        %v840 = vrot.slane %v825, 2
        %v841 = vrot.slane %v821, 2
        %v842 = vsel %vm527, %v840, %v841
        %v843 = vrot.slane %v826, 2
        %v844 = vsel %vm527, %v841, %v843
        %845 = vrot.lane.b32.xlu0 %v842, 16
        %v846 = vpop.permute.xlu0 %845
        %847 = vrot.lane.b32.xlu0 %v844, 16
        %v848 = vpop.permute.xlu0 %847
        %v851 = vsel %vm570, %v825, %v835
        %v852 = vsel %vm570, %v821, %v837
        %v853 = vsel %vm573, %v835, %v846
        %v854 = vsel %vm573, %v837, %v848
        %v855 = vld [vmem:[%s6] sm:$0xff]
        %v856 = vld [vmem:[%s6 + $0x8] sm:$0xff]
        %v857 = vld [vmem:[%s6 + $0x10] sm:$0xff]
        %v858 = vld [vmem:[%s6 + $0x18] sm:$0xff]
        %v859 = vld [vmem:[%s6 + $0x20] sm:$0xff]
        %v860 = vld [vmem:[%s6 + $0x28] sm:$0xff]
        %v861 = vld [vmem:[%s6 + $0x30] sm:$0xff]
        %v862 = vld [vmem:[%s6 + $0x38] sm:$0xff]
        %v863 = vld [vmem:[%s6 + $0x40] sm:$0xff]
        %v864 = vld [vmem:[%s6 + $0x48] sm:$0xff]
        %v865 = vld [vmem:[%s6 + $0x50] sm:$0xff]
        %v866 = vld [vmem:[%s6 + $0x58] sm:$0xff]
        %v867 = vld [vmem:[%s6 + $0x60] sm:$0xff]
        %v868 = vld [vmem:[%s6 + $0x68] sm:$0xff]
        %v869 = vld [vmem:[%s6 + $0x70] sm:$0xff]
        %v870 = vld [vmem:[%s6 + $0x78] sm:$0xff]
        %v871 = vld [vmem:[%s6 + $0x80] sm:$0xff]
        %v872 = vld [vmem:[%s6 + $0x88] sm:$0xff]
        %v873 = vld [vmem:[%s6 + $0x90] sm:$0xff]
        %v874 = vld [vmem:[%s6 + $0x98] sm:$0xff]
        %v875 = vld [vmem:[%s6 + $0xa0] sm:$0xff]
        %v876 = vld [vmem:[%s6 + $0xa8] sm:$0xff]
        %v877 = vld [vmem:[%s6 + $0xb0] sm:$0xff]
        %v878 = vld [vmem:[%s6 + $0xb8] sm:$0xff]
        %v879 = vld [vmem:[%s6 + $0xc0] sm:$0xff]
        %v880 = vld [vmem:[%s6 + $0xc8] sm:$0xff]
        %v881 = vld [vmem:[%s6 + $0xd0] sm:$0xff]
        %v882 = vld [vmem:[%s7] sm:$0x1]
        %v884 = vlaneseq
        %v885 = vshrl.u32 %v884, 7
        %v886 = vsub.s32 0, %v885
        %v887 = vrot.slane %v882, %v886
        %v890 = vsel %vm576, %v853, 0
        %v893 = vsel %vm576, %v854, 0
        %895 = vmatprep.subr.mxu0 0.0
        %896 = vmatpush1.msra.mxu0 %v855
        %897 = vmatprep.subr.mxu0 0.0
        %898 = vmatpush1.msra.mxu0 %v856
        %899 = vmatprep.subr.mxu0 0.0
        %900 = vmatpush1.msra.mxu0 %v857
        %901 = vmatprep.subr.mxu0 0.0
        %902 = vmatpush1.msra.mxu0 %v858
        %903 = vmatprep.subr.mxu0 0.0
        %904 = vmatpush1.msra.mxu0 %v859
        %905 = vmatprep.subr.mxu0 0.0
        %906 = vmatpush1.msra.mxu0 %v860
        %907 = vmatprep.subr.mxu0 0.0
        %908 = vmatpush1.msra.mxu0 %v861
        %909 = vmatprep.subr.mxu0 0.0
        %910 = vmatpush1.msra.mxu0 %v862
        %911 = vmatprep.subr.mxu0 0.0
        %912 = vmatpush1.msra.mxu0 %v863
        %913 = vmatprep.subr.mxu0 0.0
        %914 = vmatpush1.msra.mxu0 %v864
        %915 = vmatprep.subr.mxu0 0.0
        %916 = vmatpush1.msra.mxu0 %v865
        %917 = vmatprep.subr.mxu0 0.0
        %918 = vmatpush1.msra.mxu0 %v866
        %919 = vmatprep.subr.mxu0 0.0
        %920 = vmatpush1.msra.mxu0 %v867
        %921 = vmatprep.subr.mxu0 0.0
        %922 = vmatpush1.msra.mxu0 %v868
        %923 = vmatprep.subr.mxu0 0.0
        %924 = vmatpush1.msra.mxu0 %v869
        %925 = vmatprep.subr.mxu0 0.0
        %926 = vmatpush1.msra.mxu0 %v870
        %927 = vmatprep.subr.mxu0 0.0
        %928 = vmatpush1.msra.mxu0 %v871
        %929 = vmatprep.subr.mxu0 0.0
        %930 = vmatpush1.msra.mxu0 %v872
        %931 = vmatprep.subr.mxu0 0.0
        %932 = vmatpush1.msra.mxu0 %v873
        %933 = vmatprep.subr.mxu0 0.0
        %934 = vmatpush1.msra.mxu0 %v874
        %935 = vmatprep.subr.mxu0 0.0
        %936 = vmatpush1.msra.mxu0 %v875
        %937 = vmatprep.subr.mxu0 0.0
        %938 = vmatpush1.msra.mxu0 %v876
        %939 = vmatprep.subr.mxu0 0.0
        %940 = vmatpush1.msra.mxu0 %v877
        %941 = vmatprep.subr.mxu0 0.0
        %942 = vmatpush1.msra.mxu0 %v878
        %943 = vmatprep.subr.mxu0 0.0
        %944 = vmatpush1.msra.mxu0 %v879
        %945 = vmatprep.subr.mxu0 0.0
        %946 = vmatpush1.msra.mxu0 %v880
        %947 = vmatprep.subr.mxu0 0.0
        %948 = vmatpush1.msra.mxu0 %v881
        %949 = vmatprep.subr.mxu0 0.0
        %950 = vmatpush1.msra.mxu0 0.0
        %951 = vmatprep.subr.mxu0 0.0
        %952 = vmatpush1.msra.mxu0 0.0
        %953 = vmatprep.subr.mxu0 0.0
        %954 = vmatpush1.msra.mxu0 0.0
        %955 = vmatprep.subr.mxu0 0.0
        %956 = vmatpush1.msra.mxu0 0.0
        %957 = vmatprep.subr.mxu0 0.0
        %958 = vmatpush1.msra.mxu0 0.0
        %959 = vmatprep.mubr.f32.mxu0 %v890
        %960 = vmatmul.mubr.f32.gmra.mrb[0].mxu0 %v851
        %v961 = vpop.f32.mrb[0].mxu0
        %v962 = vadd.f32 %v887, %v961
        %v963 = vpop.f32.mrb[0].mxu0
        %964 = vmatprep.mubr.f32.mxu0 %v893
        %965 = vmatmul.mubr.f32.gmra.mrb[0].mxu0 %v852
        %v966 = vpop.f32.mrb[0].mxu0
        %v967 = vadd.f32 %v887, %v966
        %v968 = vpop.f32.mrb[0].mxu0
        %969 = vdwg.mxu0
        %v970 = vmax.f32 %v962, 0.0
        %v971 = vmax.f32 %v967, 0.0
        %vm972 = vcmask 523264
        %973 = vst.msk [vmem:[%s311] sm:$0xff] %vm972, %v970
        %974 = vst.msk [vmem:[%s311 + $0x8] sm:$0xff] %vm972, %v971
        %s975 = sand.u32 %s208, 1
        %s976 = scalar_lea.sflag [#allocation3], %s975
        %s977 = sand.u32 %s208, 1
        %s978 = smul.addr %s977, 16
        %s979 = scalar_lea.vmem [#allocation2], %s978
        // Predicated region
        $region53: #{tpu_custom_call.1} parent=51 // pred_check
          %p980 = pneg %p218
        $region54: #{tpu_custom_call.1} parent=51 // pred_check_branch
          %982 = sbr.rel (%p980) target = $region56
        $region55: #{tpu_custom_call.1} parent=51 // pred_region
          %s984 = ssub.s32 256, 256
          %985 = vsyncadd %s976, %s984
          %s986 = smul.addr %s22, 2
          %s987 = smul.addr %s986, 128
          %s988 = scalar_lea.hbm %s8, %s987
          %s989 = sshll.u32 %s979, 4
          %s990 = int_to_ptr.vmem [resolvable:$true] %s989
          %995 = dma.vmem_to_hbm [thread:$0]  %s990, 256, %s988, %s976, 128, 128, 8
        $region56: #{tpu_custom_call.1} parent=51 // pred_fallthru
          _
      $region52: #{tpu_custom_call.1} parent=5 // pred_fallthru
        _
      %p996 = scmp.le.s32.totalorder 2, %s17
      // Predicated region
      $region57: #{tpu_custom_call.1} parent=5 // pred_check
        %p997 = pneg %p996
      $region58: #{tpu_custom_call.1} parent=5 // pred_check_branch
        %999 = sbr.rel (%p997) target = $region60
      $region59: #{tpu_custom_call.1} parent=5 // pred_region
        %s1000 = ssub.s32 %s17, 2
        // Predicated region
        $region61: #{tpu_custom_call.1} parent=59 // pred_check
          %p1001 = pneg %p224
        $region62: #{tpu_custom_call.1} parent=59 // pred_check_branch
          %1003 = sbr.rel (%p1001) target = $region64
        $region63: #{tpu_custom_call.1} parent=59 // pred_region
          %s1004 = sand.u32 %s209, 1
          %s1005 = scalar_lea.sflag [#allocation3], %s1004
          %s1006 = sand.u32 %s209, 1
          %s1007 = smul.addr %s1006, 16
          %s1008 = scalar_lea.vmem [#allocation2], %s1007
          %1009 = dma.done %s1005, 256
        $region64: #{tpu_custom_call.1} parent=59 // pred_fallthru
          _
      $region60: #{tpu_custom_call.1} parent=5 // pred_fallthru
        _
    $region6: #{tpu_custom_call.1} parent=1 // loop_footer
      %s21 = sadd.s32 1, %s17
    $region7: #{tpu_custom_call.1} parent=1 // loop_footer_branch
      %16 = sbr.rel target = $region3
    $region8: #{tpu_custom_call.1} parent=1 // loop_exit
      _
    %1010 = vsyncpa [#allocation3], 1
    %s1011 = scalar_lea.sflag [#allocation3], 1
    %1012 = vsyncpa %s1011, 1

</llo_original>
